<compile_context>
chip_gen: v7x
topology: tpu7x:2x2x1
jax: 0.10.0
libtpu: 0.0.40
codegen_flags: <defaults>
</compile_context>

<pallas_src>
import numpy as np
import jax
import jax.numpy as jnp
from jax.experimental import pallas as pl
from jax.experimental.pallas import tpu as pltpu


# ----------------------------------------------------------------------------
# Pallas kernel: one M-tile of the transposed conv-as-GEMM.
#   w_ref:   [O8, K_pad]   masked weight   (VMEM resident across grid steps)
#   p_ref:   [K_pad, TM]   im2col patches, transposed (M on lanes)
#   b_ref:   [O8, 1]       f32 bias        (VMEM resident across grid steps)
#   out_ref: [O8, TM]      f32 output tile (lane-dense stores)
# ----------------------------------------------------------------------------
def _conv_matmul_kernel(w_ref, p_ref, b_ref, out_ref):
    acc = jnp.dot(w_ref[...], p_ref[...],
                  preferred_element_type=jnp.float32)          # MXU, f32 accum
    out_ref[...] = (acc + b_ref[...]).astype(out_ref.dtype)    # bias bcast on lanes


# ----------------------------------------------------------------------------
# Wrapper-side helpers (glue, not the hot path)
# ----------------------------------------------------------------------------
def _round_up(x, m):
    return (x + m - 1) // m * m


def _choose_tm(m_rows):
    # M sits on the lane axis -> TM must be a multiple of 128.
    # Target >= 4 grid steps so that under dimension_semantics=("parallel",)
    # each of v7x's 2 TensorCores gets >= 2 pipelined steps (DMA overlap),
    # while still amortizing the ~0.35 us per-step overhead on v5e/v6e with
    # large tiles.  With K_pad <= 40 the double buffers stay tiny, so the
    # ceiling (8192) never threatens even v7x's 64 MiB VMEM.
    m128 = _round_up(m_rows, 128)
    tm = max(128, m128 // 4 // 128 * 128)
    return min(tm, 8192)


def _im2col_nchw_T(x, kh, kw, pad_h, pad_w):
    """x: [N, C, H, W] -> transposed patches [C*KH*KW, N*H*W].

    K ordering is (C slowest, then KH, KW), matching
    weight.reshape(O, C*KH*KW); M ordering is (N, H, W) row-major."""
    n, c, h, w = x.shape
    xp = jnp.pad(x, ((0, 0), (0, 0), (pad_h, pad_h), (pad_w, pad_w)))
    cols = []
    for i in range(kh):
        for j in range(kw):
            cols.append(xp[:, :, i:i + h, j:j + w])            # [N, C, H, W]
    p = jnp.stack(cols, axis=0)                                # [KH*KW, N, C, H, W]
    p = p.transpose(2, 0, 1, 3, 4)                             # [C, KH*KW, N, H, W]
    return p.reshape(c * kh * kw, n * h * w)                   # [K, M]


def single_layer_model_forward(x, weight, bias, mask_logits, *,
                               compute_dtype=jnp.bfloat16,
                               return_nhwc=False):
    """Forward of SingleLayerModel with a frozen RB-sparsified 'same' Conv2d.

    x: [N, C, H, W] f32; weight/mask_logits: [O, C, KH, KW]; bias: [O].
    compute_dtype: bf16 by default (all TPU gens are bf16-native on the MXU
        and the kernel is HBM-bound, so this is a pure bandwidth win);
        accumulation, bias and output stay f32.
    """
    n, c, h, w = x.shape
    o, ci, kh, kw = weight.shape
    assert ci == c, "channel mismatch"
    assert kh % 2 == 1 and kw % 2 == 1, "'same' padding assumes odd kernels"
    pad_h, pad_w = kh // 2, kw // 2

    # Frozen RB sparsity pre-op (UpdateWeight): sigmoid(m) > 0.5  <=>  m > 0.
    # Applied once per forward in the wrapper, exactly like the pre-hook.
    masked_w = weight * (mask_logits > 0.0).astype(weight.dtype)

    k_dim = c * kh * kw
    m_dim = n * h * w
    patches_t = _im2col_nchw_T(x, kh, kw, pad_h, pad_w)        # [K, M]

    # K padded only to the sublane multiple (36 -> 40), NOT to 128: the kernel
    # is memory-bound, so MXU fill is irrelevant but patch bytes are not.
    # O padded only to the sublane multiple (8 -> 8 here).
    k_pad = _round_up(k_dim, 8)
    o_pad = _round_up(o, 8)
    tm = _choose_tm(m_dim)
    m_pad = _round_up(m_dim, tm)

    patches_p = jnp.pad(patches_t, ((0, k_pad - k_dim), (0, m_pad - m_dim))
                        ).astype(compute_dtype)                # [K_pad, M_pad]
    w_p = jnp.pad(masked_w.reshape(o, k_dim),
                  ((0, o_pad - o), (0, k_pad - k_dim))
                  ).astype(compute_dtype)                      # [O_pad, K_pad]
    b_p = jnp.pad(bias.reshape(o, 1).astype(jnp.float32),
                  ((0, o_pad - o), (0, 0)))                    # [O_pad, 1]

    # VMEM budget: double-buffered patch + output tiles plus resident W/bias.
    # Cap at 48 MiB so there is headroom under v7x's 64 MiB physical VMEM
    # (compiler scratch + per-core duplicated residents under "parallel").
    in_bytes = jnp.dtype(compute_dtype).itemsize
    est_vmem = (2 * k_pad * tm * in_bytes          # patches double buffer
                + 2 * o_pad * tm * 4               # output double buffer (f32)
                + o_pad * k_pad * in_bytes         # resident weight
                + o_pad * 4)                       # resident bias
    vmem_limit = int(min(max(4 * est_vmem, 16 * 2 ** 20), 48 * 2 ** 20))

    grid = (m_pad // tm,)
    out = pl.pallas_call(
        _conv_matmul_kernel,
        out_shape=jax.ShapeDtypeStruct((o_pad, m_pad), jnp.float32),
        grid=grid,
        in_specs=[
            pl.BlockSpec((o_pad, k_pad), lambda i: (0, 0)),    # weight: VMEM resident
            pl.BlockSpec((k_pad, tm), lambda i: (0, i)),       # patches: tiled over M
            pl.BlockSpec((o_pad, 1), lambda i: (0, 0)),        # bias:   VMEM resident
        ],
        out_specs=pl.BlockSpec((o_pad, tm), lambda i: (0, i)),
        compiler_params=pltpu.CompilerParams(
            # M tiles are independent -> shard across v7x's 2 TensorCores
            # (harmless no-op on single-core v5e/v6e).
            dimension_semantics=("parallel",),
            vmem_limit_bytes=vmem_limit,
        ),
    )(w_p, patches_p, b_p)

    # Drop padding on the NARROW axes only; out is [O, N*H*W].
    out = out[:o, :m_dim]
    y = out.reshape(o, n, h, w)                                # [O, N, H, W]
    if return_nhwc:
        return y.transpose(1, 2, 3, 0)                         # [N, H, W, O]
    return y.transpose(1, 0, 2, 3)                             # NCHW (PyTorch layout)


# ----------------------------------------------------------------------------
# Pure-JAX reference (matches the PyTorch module forward)
# ----------------------------------------------------------------------------
def _reference(x, weight, bias, mask_logits):
    wm = weight * (jax.nn.sigmoid(mask_logits) > 0.5).astype(weight.dtype)
    y = jax.lax.conv_general_dilated(
        x, wm, window_strides=(1, 1), padding="SAME",
        dimension_numbers=("NCHW", "OIHW", "NCHW"))
    return y + bias.reshape(1, -1, 1, 1)


if __name__ == "__main__":
    key = jax.random.PRNGKey(0)
    k_x, k_w, k_b, k_m = jax.random.split(key, 4)

    N, C, H, W = 2, 4, 16, 16
    O, KH, KW = 8, 3, 3

    x = jax.random.normal(k_x, (N, C, H, W), dtype=jnp.float32)
    weight = jax.random.normal(k_w, (O, C, KH, KW), dtype=jnp.float32) * 0.1
    bias = jax.random.normal(k_b, (O,), dtype=jnp.float32) * 0.1
    # RBSparsifyingWeight.__init__ sets mask = logit(0.99) everywhere (all
    # kept); use mixed-sign logits here so the binary mask actually prunes.
    mask_logits = jax.random.normal(k_m, (O, C, KH, KW), dtype=jnp.float32)

    # Default path: bf16 operands (f32 accumulation / bias / output).
    y = single_layer_model_forward(x, weight, bias, mask_logits)
    y = jax.block_until_ready(y)

    y_ref = jax.block_until_ready(_reference(x, weight, bias, mask_logits))
    # bf16 operands -> relaxed tolerance vs the f32 conv reference.
    np.testing.assert_allclose(np.asarray(y), np.asarray(y_ref),
                               rtol=2e-2, atol=2e-2)

    # Also verify the bit-tight f32 path once.
    y32 = jax.block_until_ready(
        single_layer_model_forward(x, weight, bias, mask_logits,
                                   compute_dtype=jnp.float32))
    np.testing.assert_allclose(np.asarray(y32), np.asarray(y_ref),
                               rtol=1e-4, atol=1e-4)

    print("KERNEL_OK")
</pallas_src>

<mosaic_0001>
module attributes {stable_mosaic.version = 11 : i64} {
  func.func @_conv_matmul_kernel(%arg0: i32, %arg1: memref<8x40xbf16, #tpu.memory_space<vmem>>, %arg2: memref<40x128xbf16, #tpu.memory_space<vmem>>, %arg3: memref<8x1xf32, #tpu.memory_space<vmem>>, %arg4: memref<8x128xf32, #tpu.memory_space<vmem>>) attributes {dimension_semantics = [#tpu.dimension_semantics<parallel>], iteration_bounds = array<i64: 4>, scalar_prefetch = 0 : i64, scratch_operands = 0 : i64, tpu.core_type = #tpu.core_type<tc>, window_params = [{pipeline_mode = #tpu.pipeline_mode<synchronous>, transform_indices = @transform_0, window_bounds = array<i64: 8, 40>}, {transform_indices = @transform_1, window_bounds = array<i64: 40, 128>}, {pipeline_mode = #tpu.pipeline_mode<synchronous>, transform_indices = @transform_2, window_bounds = array<i64: 8, 1>}, {transform_indices = @transform_3, window_bounds = array<i64: 8, 128>}]} {
    %c0 = arith.constant 0 : index
    %c0_0 = arith.constant 0 : index
    %0 = vector.load %arg1[%c0, %c0_0] : memref<8x40xbf16, #tpu.memory_space<vmem>>, vector<8x40xbf16>
    %c0_1 = arith.constant 0 : index
    %c0_2 = arith.constant 0 : index
    %1 = vector.load %arg2[%c0_1, %c0_2] : memref<40x128xbf16, #tpu.memory_space<vmem>>, vector<40x128xbf16>
    %cst = arith.constant dense<0.000000e+00> : vector<8x128xf32>
    %2 = tpu.matmul %0, %1, %cst {dimension_numbers = #tpu.dot_dimension_numbers<[1], [0], [0], [1], [0, 0, 1, 1], [], []>} : vector<8x40xbf16>, vector<40x128xbf16>, vector<8x128xf32> -> vector<8x128xf32>
    %c0_3 = arith.constant 0 : index
    %c0_4 = arith.constant 0 : index
    %3 = vector.load %arg3[%c0_3, %c0_4] : memref<8x1xf32, #tpu.memory_space<vmem>>, vector<8x1xf32>
    %4 = vector.broadcast %3 : vector<8x1xf32> to vector<8x128xf32>
    %5 = arith.addf %2, %4 : vector<8x128xf32>
    %c0_5 = arith.constant 0 : index
    %c0_6 = arith.constant 0 : index
    %6 = vector.load %arg4[%c0_5, %c0_6] : memref<8x128xf32, #tpu.memory_space<vmem>>, vector<8x128xf32>
    tpu.vector_store %arg4[%c0_5, %c0_6], %5 {strides = array<i32>} : memref<8x128xf32, #tpu.memory_space<vmem>>, vector<8x128xf32>,
    return
  }
  func.func @transform_0(%arg0: i32) -> (i32, i32) {
    %c0_i32 = arith.constant 0 : i32
    %c0_i32_0 = arith.constant 0 : i32
    %c0_i32_1 = arith.constant 0 : i32
    return %c0_i32, %c0_i32_0 : i32, i32
  }
  func.func @transform_1(%arg0: i32) -> (i32, i32) {
    %c0_i32 = arith.constant 0 : i32
    %c0_i32_0 = arith.constant 0 : i32
    return %c0_i32, %arg0 : i32, i32
  }
  func.func @transform_2(%arg0: i32) -> (i32, i32) {
    %c0_i32 = arith.constant 0 : i32
    %c0_i32_0 = arith.constant 0 : i32
    %c0_i32_1 = arith.constant 0 : i32
    return %c0_i32, %c0_i32_0 : i32, i32
  }
  func.func @transform_3(%arg0: i32) -> (i32, i32) {
    %c0_i32 = arith.constant 0 : i32
    %c0_i32_0 = arith.constant 0 : i32
    return %c0_i32, %arg0 : i32, i32
  }
}

</mosaic_0001>

<llo_original>
// kernel: tpu_custom_call.1
$region0: #{tpu_custom_call.1}
  #allocation0 [shape = 'u32[]', space=smem, size = 0x4, offset = 0x4, fixed_abs, tag = 'smem constant byte address 0x4 - core index']
  #allocation1 [shape = 'u32[144,128]{1,0:T(1,128)}', space=vmem, size = 0x12000, scoped, tag = 'internal scratch']
  %s0 = inlined_call_operand.vmem [shape: bf16[8,40], index: 0, kind: input, shape index: {}]
  %s1 = inlined_call_operand.hbm [shape: bf16[40,512], index: 1, kind: input, shape index: {}]
  %s2 = inlined_call_operand.vmem [shape: f32[8,1], index: 2, kind: input, shape index: {}]
  %s3 = inlined_call_operand.hbm [shape: f32[8,512], index: 3, kind: output, shape index: {}]
  %s4 = sld [smem:[#allocation0]]
  $region49: #{tpu_custom_call.1} parent=0
    _
  %s6 = ssub.s32 1, %s4
  %s7 = scalar_select 0, %s6, %s4
  $region1: #{tpu_custom_call.1} parent=0
    #allocation2 [shape = 'u8[20480]{0}', space=vmem, size = 0x5000, scoped, tag = 'input window, operand 1']
    #allocation3 [shape = 's32[2]{0}', space=sflag, size = 0x8, scoped, tag = 'scoped memory for tpu_custom_call.1']
    #allocation4 [shape = 's32[2]{0}', space=sflag, size = 0x8, scoped, tag = 'scoped memory for tpu_custom_call.1']
    #allocation5 [shape = 'u8[8192]{0}', space=vmem, size = 0x2000, scoped, tag = 'output window, operand 0']
    %8 = vsyncpa [#allocation3], 0
    %s9 = scalar_lea.sflag [#allocation3], 1
    %10 = vsyncpa %s9, 0
    %11 = vsyncpa [#allocation4], 0
    %s12 = scalar_lea.sflag [#allocation4], 1
    %13 = vsyncpa %s12, 0
    loop: start=0, step=1, limit=6
    $region2: #{tpu_custom_call.1} parent=1 // loop_pre_header
      _
    $region3: #{tpu_custom_call.1} parent=1 // loop_header
      %s15 = sphi 0, %s19
      %p16 = scmp.ge.s32.totalorder %s15, 6
      %s23 = sphi 0, %s23
      %s25 = sphi 0, %s23
      %s26 = sphi 0, %s25
      %s40 = sphi 0, %s26
      %s46 = sphi 0, %s48
      %s49 = sphi 0, %s46
      %s50 = sphi 0, %s49
      %s66 = sphi 0, %s50
      %s70 = sphi 0, %s70
      %s72 = sphi 0, %s70
      %s73 = sphi 0, %s72
      %s87 = sphi 0, %s73
      %s93 = sphi 0, %s95
      %s96 = sphi 0, %s93
      %s97 = sphi 0, %s96
      %s113 = sphi 0, %s97
    $region4: #{tpu_custom_call.1} parent=1 // loop_header_branch
      %18 = sbr.rel (%p16) target = $region8
    $region5: #{tpu_custom_call.1} parent=1 // loop_body
      %s20 = ssub.s32 %s15, 1
      %s21 = ssub.s32 %s15, 2
      %s22 = sadd.s32 %s15, 1
      %s24 = sadd.s32 %s23, 1
      %p27 = scmp.eq.s32.totalorder %s15, 3
      %p28 = scmp.ne.s32.totalorder %s23, %s25
      %p29 = scmp.eq.s32.totalorder %s15, 0
      %p30 = por %p28, %p29
      %p31 = scmp.ne.s32.totalorder %s23, %s25
      %p32 = scmp.eq.s32.totalorder %s20, 3
      %p33 = por %p31, %p32
      %p34 = scmp.ne.s32.totalorder %s25, %s26
      %p35 = scmp.eq.s32.totalorder %s20, 0
      %p36 = por %p34, %p35
      %p37 = scmp.ne.s32.totalorder %s25, %s26
      %p38 = scmp.eq.s32.totalorder %s21, 3
      %p39 = por %p37, %p38
      %p41 = scmp.ne.s32.totalorder %s26, %s40
      %p42 = scmp.eq.s32.totalorder %s21, 0
      %p43 = por %p41, %p42
      %s44 = ssub.s32 %s15, %s22
      %p45 = scmp.eq.s32.totalorder %s44, 0
      %s47 = sadd.s32 %s46, 1
      %s48 = scalar_select %p45, %s46, %s47
      %p51 = pneg %p45
      %p52 = scmp.eq.s32.totalorder %s15, 3
      %p53 = por %p51, %p52
      %p54 = scmp.ne.s32.totalorder %s46, %s49
      %p55 = scmp.eq.s32.totalorder %s15, 0
      %p56 = por %p54, %p55
      %p57 = scmp.ne.s32.totalorder %s46, %s49
      %p58 = scmp.eq.s32.totalorder %s20, 3
      %p59 = por %p57, %p58
      %p60 = scmp.ne.s32.totalorder %s49, %s50
      %p61 = scmp.eq.s32.totalorder %s20, 0
      %p62 = por %p60, %p61
      %p63 = scmp.ne.s32.totalorder %s49, %s50
      %p64 = scmp.eq.s32.totalorder %s21, 3
      %p65 = por %p63, %p64
      %p67 = scmp.ne.s32.totalorder %s50, %s66
      %p68 = scmp.eq.s32.totalorder %s21, 0
      %p69 = por %p67, %p68
      %s71 = sadd.s32 %s70, 1
      %p74 = scmp.eq.s32.totalorder %s15, 3
      %p75 = scmp.ne.s32.totalorder %s70, %s72
      %p76 = scmp.eq.s32.totalorder %s15, 0
      %p77 = por %p75, %p76
      %p78 = scmp.ne.s32.totalorder %s70, %s72
      %p79 = scmp.eq.s32.totalorder %s20, 3
      %p80 = por %p78, %p79
      %p81 = scmp.ne.s32.totalorder %s72, %s73
      %p82 = scmp.eq.s32.totalorder %s20, 0
      %p83 = por %p81, %p82
      %p84 = scmp.ne.s32.totalorder %s72, %s73
      %p85 = scmp.eq.s32.totalorder %s21, 3
      %p86 = por %p84, %p85
      %p88 = scmp.ne.s32.totalorder %s73, %s87
      %p89 = scmp.eq.s32.totalorder %s21, 0
      %p90 = por %p88, %p89
      %s91 = ssub.s32 %s15, %s22
      %p92 = scmp.eq.s32.totalorder %s91, 0
      %s94 = sadd.s32 %s93, 1
      %s95 = scalar_select %p92, %s93, %s94
      %p98 = pneg %p92
      %p99 = scmp.eq.s32.totalorder %s15, 3
      %p100 = por %p98, %p99
      %p101 = scmp.ne.s32.totalorder %s93, %s96
      %p102 = scmp.eq.s32.totalorder %s15, 0
      %p103 = por %p101, %p102
      %p104 = scmp.ne.s32.totalorder %s93, %s96
      %p105 = scmp.eq.s32.totalorder %s20, 3
      %p106 = por %p104, %p105
      %p107 = scmp.ne.s32.totalorder %s96, %s97
      %p108 = scmp.eq.s32.totalorder %s20, 0
      %p109 = por %p107, %p108
      %p110 = scmp.ne.s32.totalorder %s96, %s97
      %p111 = scmp.eq.s32.totalorder %s21, 3
      %p112 = por %p110, %p111
      %p114 = scmp.ne.s32.totalorder %s97, %s113
      %p115 = scmp.eq.s32.totalorder %s21, 0
      %p116 = por %p114, %p115
      %p117 = scmp.le.s32.totalorder 1, %s15
      %p118 = scmp.lt.s32.totalorder %s15, 5
      %p119 = pnand %p117, %p118
      %p120 = pneg %p119
      // Predicated region
      $region9: #{tpu_custom_call.1} parent=5 // pred_check
        _
      $region10: #{tpu_custom_call.1} parent=5 // pred_check_branch
        %122 = sbr.rel (%p119) target = $region12
      $region11: #{tpu_custom_call.1} parent=5 // pred_region
        %s123 = ssub.s32 %s15, 1
        // Predicated region
        $region13: #{tpu_custom_call.1} parent=11 // pred_check
          %p124 = pneg %p36
        $region14: #{tpu_custom_call.1} parent=11 // pred_check_branch
          %126 = sbr.rel (%p124) target = $region16
        $region15: #{tpu_custom_call.1} parent=11 // pred_region
          _
        $region16: #{tpu_custom_call.1} parent=11 // pred_fallthru
          _
        // Predicated region
        $region17: #{tpu_custom_call.1} parent=11 // pred_check
          %p127 = pneg %p83
        $region18: #{tpu_custom_call.1} parent=11 // pred_check_branch
          %129 = sbr.rel (%p127) target = $region20
        $region19: #{tpu_custom_call.1} parent=11 // pred_region
          _
        $region20: #{tpu_custom_call.1} parent=11 // pred_fallthru
          _
      $region12: #{tpu_custom_call.1} parent=5 // pred_fallthru
        _
      %p130 = scmp.lt.s32.totalorder %s15, 4
      // Predicated region
      $region21: #{tpu_custom_call.1} parent=5 // pred_check
        %p131 = pneg %p130
      $region22: #{tpu_custom_call.1} parent=5 // pred_check_branch
        %133 = sbr.rel (%p131) target = $region24
      $region23: #{tpu_custom_call.1} parent=5 // pred_region
        // Predicated region
        $region25: #{tpu_custom_call.1} parent=23 // pred_check
          %p134 = pneg %p56
        $region26: #{tpu_custom_call.1} parent=23 // pred_check_branch
          %136 = sbr.rel (%p134) target = $region28
        $region27: #{tpu_custom_call.1} parent=23 // pred_region
          %s137 = sand.u32 %s46, 1
          %s138 = scalar_lea.sflag [#allocation3], %s137
          %s139 = sand.u32 %s46, 1
          %s140 = smul.addr %s139, 20
          %s141 = scalar_lea.vmem [#allocation2], %s140
          %s143 = ssub.s32 320, 320
          %144 = vsyncadd %s138, %s143
          %s145 = smul.addr %s15, 64
          %s146 = scalar_lea.hbm %s1, %s145
          %s147 = sshll.u32 %s141, 4
          %s148 = int_to_ptr.vmem [resolvable:$true] %s147
          %153 = dma.hbm_to_vmem [thread:$0]  %s146, 320, %s148, %s138, 256, 64, 4
        $region28: #{tpu_custom_call.1} parent=23 // pred_fallthru
          _
      $region24: #{tpu_custom_call.1} parent=5 // pred_fallthru
        _
      %p154 = scmp.le.s32.totalorder 1, %s15
      %p155 = scmp.lt.s32.totalorder %s15, 5
      %p156 = pnand %p154, %p155
      %p157 = pneg %p156
      // Predicated region
      $region29: #{tpu_custom_call.1} parent=5 // pred_check
        _
      $region30: #{tpu_custom_call.1} parent=5 // pred_check_branch
        %159 = sbr.rel (%p156) target = $region32
      $region31: #{tpu_custom_call.1} parent=5 // pred_region
        %s160 = ssub.s32 %s15, 1
        %s161 = sand.u32 %s49, 1
        %s162 = scalar_lea.sflag [#allocation3], %s161
        %s163 = sand.u32 %s49, 1
        %s164 = smul.addr %s163, 20
        %s165 = scalar_lea.vmem [#allocation2], %s164
        // Predicated region
        $region33: #{tpu_custom_call.1} parent=31 // pred_check
          %p166 = pneg %p62
        $region34: #{tpu_custom_call.1} parent=31 // pred_check_branch
          %168 = sbr.rel (%p166) target = $region36
        $region35: #{tpu_custom_call.1} parent=31 // pred_region
          %169 = dma.done %s162, 320
        $region36: #{tpu_custom_call.1} parent=31 // pred_fallthru
          _
        %p170 = pneg %p36
        %p171 = pneg %p33
        %s172 = sand.u32 %s49, 1
        %s173 = scalar_lea.sflag [#allocation3], %s172
        %s174 = sand.u32 %s49, 1
        %s175 = smul.addr %s174, 20
        %s176 = scalar_lea.vmem [#allocation2], %s175
        %p177 = pneg %p62
        %p178 = pneg %p59
        %p179 = pneg %p83
        %p180 = pneg %p80
        %p181 = pneg %p109
        %p182 = pneg %p106
        %s183 = sand.u32 %s96, 1
        %s184 = scalar_lea.sflag [#allocation4], %s183
        %s185 = sand.u32 %s96, 1
        %s186 = smul.addr %s185, 8
        %s187 = scalar_lea.vmem [#allocation5], %s186
        %v189 = vld [vmem:[%s0] sm:$0xf]
        %v190 = vld [vmem:[%s165] sm:$0xf]
        %v191 = vld [vmem:[%s165 + $0x4] sm:$0xf]
        %v192 = vld [vmem:[%s165 + $0x8] sm:$0xf]
        %v193 = vld [vmem:[%s165 + $0xc] sm:$0xf]
        %v194 = vld [vmem:[%s165 + $0x10] sm:$0xf]
        %v195 = vld [vmem:[%s2] sm:$0xff]
        %197 = vset.pattern.permute.xlu0 0
        %198 = vperm.xlu0 %197, %v195
        %v199 = vpop.permute.xlu0 %198
        %v206 = vunpack.c.l.b16 %v190
        %v207 = vunpack.c.l.b16 %v191
        %v208 = vunpack.c.l.b16 %v192
        %v209 = vunpack.c.l.b16 %v193
        %v210 = vunpack.c.l.b16 %v194
        %v211 = vpack.c.b16 %v207, %v206
        %v212 = vpack.c.b16 %v209, %v208
        %v213 = vpack.c.b16 %v210, %v210
        %vm216 = vcmask 326656
        %v218 = vsel %vm216, %v189, 0
        %vm220 = vcmask 1043456
        %v222 = vsel %vm220, %v213, 0
        %224 = vmatprep.subr.bf16.mxu0 0
        %225 = vmatpush1.bf16.msra.mxu0 %v211
        %226 = vmatprep.subr.bf16.mxu0 0
        %227 = vmatpush1.bf16.msra.mxu0 %v212
        %228 = vmatprep.subr.bf16.mxu0 0
        %229 = vmatpush1.bf16.msra.mxu0 %v222
        %230 = vmatprep.subr.bf16.mxu0 0
        %231 = vmatpush1.bf16.msra.mxu0 0
        %232 = vmatprep.subr.bf16.mxu0 0
        %233 = vmatpush1.bf16.msra.mxu0 0
        %234 = vmatprep.subr.bf16.mxu0 0
        %235 = vmatpush1.bf16.msra.mxu0 0
        %236 = vmatprep.subr.bf16.mxu0 0
        %237 = vmatpush1.bf16.msra.mxu0 0
        %238 = vmatprep.subr.bf16.mxu0 0
        %239 = vmatpush1.bf16.msra.mxu0 0
        %240 = vmatprep.subr.bf16.mxu0 0
        %241 = vmatpush1.bf16.msra.mxu0 0
        %242 = vmatprep.subr.bf16.mxu0 0
        %243 = vmatpush1.bf16.msra.mxu0 0
        %244 = vmatprep.subr.bf16.mxu0 0
        %245 = vmatpush1.bf16.msra.mxu0 0
        %246 = vmatprep.subr.bf16.mxu0 0
        %247 = vmatpush1.bf16.msra.mxu0 0
        %248 = vmatprep.subr.bf16.mxu0 0
        %249 = vmatpush1.bf16.msra.mxu0 0
        %250 = vmatprep.subr.bf16.mxu0 0
        %251 = vmatpush1.bf16.msra.mxu0 0
        %252 = vmatprep.subr.bf16.mxu0 0
        %253 = vmatpush1.bf16.msra.mxu0 0
        %254 = vmatprep.subr.bf16.mxu0 0
        %255 = vmatpush1.bf16.msra.mxu0 0
        %256 = vmatprep.mubr.bf16.mxu0 0
        %257 = vmatmul.mubr.bf16.gmra.mrb[0].mxu0 %v218
        %v258 = vpop.f32.mrb[0].mxu0
        %v259 = vadd.f32 %v199, %v258
        %v260 = vpop.f32.mrb[0].mxu0
        %v261 = vpop.f32.mrb[0].mxu0
        %v262 = vpop.f32.mrb[0].mxu0
        %263 = vdwg.mxu0
        %264 = vst [vmem:[%s187] sm:$0xff] %v259
        %s265 = sand.u32 %s96, 1
        %s266 = scalar_lea.sflag [#allocation4], %s265
        %s267 = sand.u32 %s96, 1
        %s268 = smul.addr %s267, 8
        %s269 = scalar_lea.vmem [#allocation5], %s268
        // Predicated region
        $region37: #{tpu_custom_call.1} parent=31 // pred_check
          %p270 = pneg %p106
        $region38: #{tpu_custom_call.1} parent=31 // pred_check_branch
          %272 = sbr.rel (%p270) target = $region40
        $region39: #{tpu_custom_call.1} parent=31 // pred_region
          %s274 = ssub.s32 128, 128
          %275 = vsyncadd %s266, %s274
          %s276 = smul.addr %s20, 128
          %s277 = scalar_lea.hbm %s3, %s276
          %s279 = sshll.u32 %s269, 4
          %s280 = int_to_ptr.vmem [resolvable:$true] %s279
          %282 = dma.vmem_to_hbm [thread:$0]  %s280, 128, %s277, %s266
        $region40: #{tpu_custom_call.1} parent=31 // pred_fallthru
          _
      $region32: #{tpu_custom_call.1} parent=5 // pred_fallthru
        _
      %p283 = scmp.le.s32.totalorder 2, %s15
      // Predicated region
      $region41: #{tpu_custom_call.1} parent=5 // pred_check
        %p284 = pneg %p283
      $region42: #{tpu_custom_call.1} parent=5 // pred_check_branch
        %286 = sbr.rel (%p284) target = $region44
      $region43: #{tpu_custom_call.1} parent=5 // pred_region
        %s287 = ssub.s32 %s15, 2
        // Predicated region
        $region45: #{tpu_custom_call.1} parent=43 // pred_check
          %p288 = pneg %p112
        $region46: #{tpu_custom_call.1} parent=43 // pred_check_branch
          %290 = sbr.rel (%p288) target = $region48
        $region47: #{tpu_custom_call.1} parent=43 // pred_region
          %s291 = sand.u32 %s97, 1
          %s292 = scalar_lea.sflag [#allocation4], %s291
          %s293 = sand.u32 %s97, 1
          %s294 = smul.addr %s293, 8
          %s295 = scalar_lea.vmem [#allocation5], %s294
          %296 = dma.done %s292, 128
        $region48: #{tpu_custom_call.1} parent=43 // pred_fallthru
          _
      $region44: #{tpu_custom_call.1} parent=5 // pred_fallthru
        _
    $region6: #{tpu_custom_call.1} parent=1 // loop_footer
      %s19 = sadd.s32 1, %s15
    $region7: #{tpu_custom_call.1} parent=1 // loop_footer_branch
      %14 = sbr.rel target = $region3
    $region8: #{tpu_custom_call.1} parent=1 // loop_exit
      _
    %297 = vsyncpa [#allocation3], 1
    %s298 = scalar_lea.sflag [#allocation3], 1
    %299 = vsyncpa %s298, 1
    %300 = vsyncpa [#allocation4], 1
    %s301 = scalar_lea.sflag [#allocation4], 1
    %302 = vsyncpa %s301, 1

</llo_original>
